<compile_context>
chip_gen: v6e
topology: v6e:2x2x1
jax: 0.10.0
libtpu: 0.0.40
codegen_flags: <defaults>
</compile_context>

<pallas_src>
import functools

import jax
import jax.numpy as jnp
from jax.experimental import pallas as pl
from jax.experimental.pallas import tpu as pltpu


def _round_up(x: int, m: int) -> int:
    return ((x + m - 1) // m) * m


def _ranked_infonce_kernel(q_ref, r_ref, sel_ref, tri_ref, a_ref, o_ref,
                           acc_ref, *, t: float, valid_b: int, block_b: int,
                           k: int):
    i = pl.program_id(0)

    @pl.when(i == 0)
    def _init():
        acc_ref[...] = jnp.zeros_like(acc_ref)

    qf = q_ref[...].astype(jnp.float32)      # (TB, D)
    rf = r_ref[...].astype(jnp.float32)      # (TB, K*D)   lane-dense results
    sel = sel_ref[...]                       # (K*D, K)    block-diagonal ones

    # Replicate q along lanes so it lines up with the (k, d) flattening of r.
    q_rep = jnp.concatenate([qf] * k, axis=1)                             # (TB, K*D)

    # D-contractions on the MXU: dot products and per-result squared norms.
    dots = jnp.dot(rf * q_rep, sel, preferred_element_type=jnp.float32)   # (TB, K)
    r_sq = jnp.dot(rf * rf, sel, preferred_element_type=jnp.float32)      # (TB, K)
    q_sq = jnp.sum(qf * qf, axis=-1, keepdims=True)                       # (TB, 1)

    # torch.nn.CosineSimilarity eps clamp.  Exact sqrt + single divide keeps
    # parity with the reference (swap to lax.rsqrt / pl.reciprocal(approx=True)
    # if ~1e-3 relative error is acceptable).  1/t folded into the divide.
    denom = jnp.maximum(jnp.sqrt(q_sq) * jnp.sqrt(r_sq), 1e-8)            # (TB, K)
    e = jnp.exp(dots / (denom * t))                                       # (TB, K)

    if valid_b % block_b:  # static check: mask zero-padded batch rows
        row = (jax.lax.broadcasted_iota(jnp.int32, (block_b, k), 0)
               + i * block_b)
        e = jnp.where(row < valid_b, e, 0.0)

    acc_ref[...] += jnp.sum(e, axis=0, keepdims=True)                     # (1, K)

    @pl.when(i == pl.num_programs(0) - 1)
    def _finalize():
        exp_sims = acc_ref[...]                                           # (1, K)
        cum = jnp.dot(exp_sims, tri_ref[...],
                      preferred_element_type=jnp.float32)                 # (1, K)
        # alphas zero-padded at k=0, so the k=0 term drops out.
        loss = -jnp.sum((jnp.log(exp_sims) - jnp.log(cum)) * a_ref[...])
        o_ref[0, 0] = loss


def ranked_info_nce(query, results, alphas, t: float = 1.0, *,
                    block_b: int | None = None,
                    tile_budget_bytes: int = 6 * 1024 * 1024):
    """Pallas implementation of RankedInfoNCE.forward (returns a scalar)."""
    B, D = query.shape
    _, K, _ = results.shape

    # Batch-tile size: largest multiple of 8 whose results tile fits the budget
    # (the pipeline double-buffers it); clamp to the (padded) batch.
    if block_b is None:
        itemsize = jnp.dtype(results.dtype).itemsize
        rows = tile_budget_bytes // max(1, K * D * itemsize)
        block_b = max(8, (rows // 8) * 8)
    block_b = max(8, min(block_b, _round_up(B, 8)))
    b_pad = _round_up(B, block_b)
    num_tiles = b_pad // block_b

    # Lane-dense view of results; keep the input dtype (no f32 upcast).
    results_2d = results.reshape(B, K * D)
    if b_pad != B:
        query = jnp.pad(query, ((0, b_pad - B), (0, 0)))
        results_2d = jnp.pad(results_2d, ((0, b_pad - B), (0, 0)))

    # Constants hoisted out of the kernel.
    sel = jnp.kron(jnp.eye(K, dtype=jnp.float32),
                   jnp.ones((D, 1), jnp.float32))                         # (K*D, K)
    tri = (jnp.arange(K)[:, None] <= jnp.arange(K)[None, :]).astype(jnp.float32)
    a_pad = jnp.concatenate([jnp.zeros((1,), jnp.float32),
                             alphas.astype(jnp.float32)]).reshape(1, K)

    kernel = functools.partial(_ranked_infonce_kernel, t=float(t),
                               valid_b=B, block_b=block_b, k=K)

    # TODO(synk): v7x dual-TensorCore split (per-core partial exp_sims with an
    # outside combine) is not implemented; single-core reduction over B.
    out = pl.pallas_call(
        kernel,
        out_shape=jax.ShapeDtypeStruct((1, 1), jnp.float32),
        grid_spec=pltpu.PrefetchScalarGridSpec(
            num_scalar_prefetch=0,
            grid=(num_tiles,),
            in_specs=[
                pl.BlockSpec((block_b, D), lambda i: (i, 0)),       # query tile
                pl.BlockSpec((block_b, K * D), lambda i: (i, 0)),   # results tile
                pl.BlockSpec((K * D, K), lambda i: (0, 0)),         # block-diag ones
                pl.BlockSpec((K, K), lambda i: (0, 0)),             # cumsum mask
                pl.BlockSpec((1, K), lambda i: (0, 0)),             # padded alphas
            ],
            out_specs=pl.BlockSpec(memory_space=pltpu.MemorySpace.SMEM),
            scratch_shapes=[pltpu.VMEM((1, K), jnp.float32)],
        ),
        compiler_params=pltpu.CompilerParams(
            dimension_semantics=("arbitrary",),
            vmem_limit_bytes=32 * 1024 * 1024,
        ),
    )(query, results_2d, sel, tri, a_pad)
    return out[0, 0]


def _reference(query, results, alphas, t: float = 1.0):
    """Pure-JAX reference mirroring the PyTorch forward."""
    q = query[:, None, :]
    dots = jnp.sum(q * results, axis=-1)
    denom = jnp.maximum(
        jnp.linalg.norm(q, axis=-1) * jnp.linalg.norm(results, axis=-1), 1e-8)
    cos = dots / denom
    exp_sims = jnp.exp(cos / t).sum(axis=0)
    cum = jnp.cumsum(exp_sims)
    return -jnp.dot(jnp.log(exp_sims[1:] / cum[1:]), alphas)


if __name__ == "__main__":
    # Small deterministic inputs: B=8 queries, K=8 ranked results, D=32 features.
    key = jax.random.PRNGKey(0)
    k1, k2, k3 = jax.random.split(key, 3)
    B, K, D = 8, 8, 32
    t = 1.0

    query = jax.random.normal(k1, (B, D), dtype=jnp.float32)
    results = jax.random.normal(k2, (B, K, D), dtype=jnp.float32)
    alphas = jax.random.uniform(k3, (K - 1,), dtype=jnp.float32)

    loss = ranked_info_nce(query, results, alphas, t=t)
    jax.block_until_ready(loss)

    ref = _reference(query, results, alphas, t=t)
    assert jnp.allclose(loss, ref, rtol=1e-5, atol=1e-5), (loss, ref)

    print("KERNEL_OK")
</pallas_src>

<mosaic_0001>
module attributes {stable_mosaic.version = 11 : i64} {
  func.func @_ranked_infonce_kernel(%arg0: i32, %arg1: memref<8x32xf32, #tpu.memory_space<vmem>>, %arg2: memref<8x256xf32, #tpu.memory_space<vmem>>, %arg3: memref<256x8xf32, #tpu.memory_space<vmem>>, %arg4: memref<8x8xf32, #tpu.memory_space<vmem>>, %arg5: memref<1x8xf32, #tpu.memory_space<vmem>>, %arg6: memref<1x1xf32, #tpu.memory_space<smem>>, %arg7: memref<1x8xf32, #tpu.memory_space<vmem>>) attributes {dimension_semantics = [#tpu.dimension_semantics<arbitrary>], iteration_bounds = array<i64: 1>, scalar_prefetch = 0 : i64, scratch_operands = 1 : i64, tpu.core_type = #tpu.core_type<tc>, window_params = [{transform_indices = @transform_0, window_bounds = array<i64: 8, 32>}, {transform_indices = @transform_1, window_bounds = array<i64: 8, 256>}, {pipeline_mode = #tpu.pipeline_mode<synchronous>, transform_indices = @transform_2, window_bounds = array<i64: 256, 8>}, {pipeline_mode = #tpu.pipeline_mode<synchronous>, transform_indices = @transform_3, window_bounds = array<i64: 8, 8>}, {pipeline_mode = #tpu.pipeline_mode<synchronous>, transform_indices = @transform_4, window_bounds = array<i64: 1, 8>}, {transform_indices = @transform_5, window_bounds = array<i64: 1, 1>}]} {
    %c0_i32 = arith.constant 0 : i32
    %0 = arith.cmpi eq, %arg0, %c0_i32 : i32
    %1 = arith.extui %0 : i1 to i32
    %c0_i32_0 = arith.constant 0 : i32
    %2 = arith.cmpi ne, %1, %c0_i32_0 : i32
    scf.if %2 {
      %cst_17 = arith.constant 0.000000e+00 : f32
      %32 = vector.broadcast %cst_17 : f32 to vector<1x8xf32>
      %c0_18 = arith.constant 0 : index
      %c0_19 = arith.constant 0 : index
      %33 = vector.load %arg7[%c0_18, %c0_19] : memref<1x8xf32, #tpu.memory_space<vmem>>, vector<1x8xf32>
      tpu.vector_store %arg7[%c0_18, %c0_19], %32 {strides = array<i32>} : memref<1x8xf32, #tpu.memory_space<vmem>>, vector<1x8xf32>,
    } else {
    }
    %c0 = arith.constant 0 : index
    %c0_1 = arith.constant 0 : index
    %3 = vector.load %arg1[%c0, %c0_1] : memref<8x32xf32, #tpu.memory_space<vmem>>, vector<8x32xf32>
    %c0_2 = arith.constant 0 : index
    %c0_3 = arith.constant 0 : index
    %4 = vector.load %arg2[%c0_2, %c0_3] : memref<8x256xf32, #tpu.memory_space<vmem>>, vector<8x256xf32>
    %c0_4 = arith.constant 0 : index
    %c0_5 = arith.constant 0 : index
    %5 = vector.load %arg3[%c0_4, %c0_5] : memref<256x8xf32, #tpu.memory_space<vmem>>, vector<256x8xf32>
    %6 = tpu.concatenate %3, %3, %3, %3, %3, %3, %3, %3 in 1 : vector<8x32xf32>, vector<8x32xf32>, vector<8x32xf32>, vector<8x32xf32>, vector<8x32xf32>, vector<8x32xf32>, vector<8x32xf32>, vector<8x32xf32> -> vector<8x256xf32>
    %7 = arith.mulf %4, %6 : vector<8x256xf32>
    %cst = arith.constant dense<0.000000e+00> : vector<8x8xf32>
    %8 = tpu.matmul %7, %5, %cst {dimension_numbers = #tpu.dot_dimension_numbers<[1], [0], [0], [1], [0, 0, 1, 1], [], []>} : vector<8x256xf32>, vector<256x8xf32>, vector<8x8xf32> -> vector<8x8xf32>
    %9 = arith.mulf %4, %4 : vector<8x256xf32>
    %cst_6 = arith.constant dense<0.000000e+00> : vector<8x8xf32>
    %10 = tpu.matmul %9, %5, %cst_6 {dimension_numbers = #tpu.dot_dimension_numbers<[1], [0], [0], [1], [0, 0, 1, 1], [], []>} : vector<8x256xf32>, vector<256x8xf32>, vector<8x8xf32> -> vector<8x8xf32>
    %11 = arith.mulf %3, %3 : vector<8x32xf32>
    %cst_7 = arith.constant dense<0.000000e+00> : vector<8xf32>
    %12 = vector.multi_reduction <add>, %11, %cst_7 [1] : vector<8x32xf32> to vector<8xf32>
    %13 = vector.shape_cast %12 : vector<8xf32> to vector<8x1xf32>
    %14 = math.sqrt %13 : vector<8x1xf32>
    %15 = math.sqrt %10 : vector<8x8xf32>
    %16 = vector.broadcast %14 : vector<8x1xf32> to vector<8x8xf32>
    %17 = arith.mulf %16, %15 : vector<8x8xf32>
    %cst_8 = arith.constant 9.99999993E-9 : f32
    %18 = vector.broadcast %cst_8 : f32 to vector<8x8xf32>
    %19 = arith.maximumf %17, %18 : vector<8x8xf32>
    %cst_9 = arith.constant 1.000000e+00 : f32
    %20 = vector.broadcast %cst_9 : f32 to vector<8x8xf32>
    %21 = arith.mulf %19, %20 : vector<8x8xf32>
    %22 = arith.divf %8, %21 : vector<8x8xf32>
    %23 = math.exp %22 : vector<8x8xf32>
    %c0_10 = arith.constant 0 : index
    %c0_11 = arith.constant 0 : index
    %24 = vector.load %arg7[%c0_10, %c0_11] : memref<1x8xf32, #tpu.memory_space<vmem>>, vector<1x8xf32>
    %cst_12 = arith.constant dense<0.000000e+00> : vector<8xf32>
    %25 = vector.multi_reduction <add>, %23, %cst_12 [0] : vector<8x8xf32> to vector<8xf32>
    %26 = vector.shape_cast %25 : vector<8xf32> to vector<1x8xf32>
    %27 = arith.addf %24, %26 : vector<1x8xf32>
    %c0_13 = arith.constant 0 : index
    %c0_14 = arith.constant 0 : index
    %28 = vector.load %arg7[%c0_13, %c0_14] : memref<1x8xf32, #tpu.memory_space<vmem>>, vector<1x8xf32>
    tpu.vector_store %arg7[%c0_13, %c0_14], %27 {strides = array<i32>} : memref<1x8xf32, #tpu.memory_space<vmem>>, vector<1x8xf32>,
    %c0_i32_15 = arith.constant 0 : i32
    %29 = arith.cmpi eq, %arg0, %c0_i32_15 : i32
    %30 = arith.extui %29 : i1 to i32
    %c0_i32_16 = arith.constant 0 : i32
    %31 = arith.cmpi ne, %30, %c0_i32_16 : i32
    scf.if %31 {
      %c0_17 = arith.constant 0 : index
      %c0_18 = arith.constant 0 : index
      %32 = vector.load %arg7[%c0_17, %c0_18] : memref<1x8xf32, #tpu.memory_space<vmem>>, vector<1x8xf32>
      %c0_19 = arith.constant 0 : index
      %c0_20 = arith.constant 0 : index
      %33 = vector.load %arg4[%c0_19, %c0_20] : memref<8x8xf32, #tpu.memory_space<vmem>>, vector<8x8xf32>
      %cst_21 = arith.constant dense<0.000000e+00> : vector<1x8xf32>
      %34 = tpu.matmul %32, %33, %cst_21 {dimension_numbers = #tpu.dot_dimension_numbers<[1], [0], [0], [1], [0, 0, 1, 1], [], []>} : vector<1x8xf32>, vector<8x8xf32>, vector<1x8xf32> -> vector<1x8xf32>
      %35 = math.log %32 : vector<1x8xf32>
      %36 = math.log %34 : vector<1x8xf32>
      %37 = arith.subf %35, %36 : vector<1x8xf32>
      %c0_22 = arith.constant 0 : index
      %c0_23 = arith.constant 0 : index
      %38 = vector.load %arg5[%c0_22, %c0_23] : memref<1x8xf32, #tpu.memory_space<vmem>>, vector<1x8xf32>
      %39 = arith.mulf %37, %38 : vector<1x8xf32>
      %40 = vector.shape_cast %39 : vector<1x8xf32> to vector<1x1x8xf32>
      %cst_24 = arith.constant dense<0.000000e+00> : vector<1xf32>
      %41 = vector.multi_reduction <add>, %40, %cst_24 [1, 2] : vector<1x1x8xf32> to vector<1xf32>
      %42 = vector.shape_cast %41 : vector<1xf32> to vector<1x1x1xf32>
      %43 = vector.extract %42[0, 0, 0] : f32 from vector<1x1x1xf32>
      %cst_25 = arith.constant 0.000000e+00 : f32
      %44 = arith.subf %cst_25, %43 : f32
      %c0_26 = arith.constant 0 : index
      %c0_27 = arith.constant 0 : index
      %45 = memref.load %arg6[%c0_26, %c0_27] : memref<1x1xf32, #tpu.memory_space<smem>>
      memref.store %44, %arg6[%c0_26, %c0_27] : memref<1x1xf32, #tpu.memory_space<smem>>
    } else {
    }
    return
  }
  func.func @transform_0(%arg0: i32) -> (i32, i32) {
    %c0_i32 = arith.constant 0 : i32
    %c0_i32_0 = arith.constant 0 : i32
    return %arg0, %c0_i32 : i32, i32
  }
  func.func @transform_1(%arg0: i32) -> (i32, i32) {
    %c0_i32 = arith.constant 0 : i32
    %c0_i32_0 = arith.constant 0 : i32
    return %arg0, %c0_i32 : i32, i32
  }
  func.func @transform_2(%arg0: i32) -> (i32, i32) {
    %c0_i32 = arith.constant 0 : i32
    %c0_i32_0 = arith.constant 0 : i32
    %c0_i32_1 = arith.constant 0 : i32
    return %c0_i32, %c0_i32_0 : i32, i32
  }
  func.func @transform_3(%arg0: i32) -> (i32, i32) {
    %c0_i32 = arith.constant 0 : i32
    %c0_i32_0 = arith.constant 0 : i32
    %c0_i32_1 = arith.constant 0 : i32
    return %c0_i32, %c0_i32_0 : i32, i32
  }
  func.func @transform_4(%arg0: i32) -> (i32, i32) {
    %c0_i32 = arith.constant 0 : i32
    %c0_i32_0 = arith.constant 0 : i32
    %c0_i32_1 = arith.constant 0 : i32
    return %c0_i32, %c0_i32_0 : i32, i32
  }
  func.func @transform_5(%arg0: i32) -> (i32, i32) {
    %c0_i32 = arith.constant 0 : i32
    %c0_i32_0 = arith.constant 0 : i32
    %c0_i32_1 = arith.constant 0 : i32
    return %c0_i32, %c0_i32_0 : i32, i32
  }
}

</mosaic_0001>

<llo_original>
// kernel: tpu_custom_call.1
$region0: #{tpu_custom_call.1}
  #allocation0 [shape = 'u32[]', space=smem, size = 0x4, offset = 0x4, fixed_abs, tag = 'smem constant byte address 0x4 - core index']
  #allocation1 [shape = 'u32[144,128]{1,0:T(1,128)}', space=vmem, size = 0x12000, scoped, tag = 'internal scratch']
  #allocation2 [shape = 'f32[1,8]{1,0:T(1,128)}', space=vmem, size = 0x200, scoped, tag = 'scratch operand']
  %s0 = inlined_call_operand.vmem [shape: f32[8,32], index: 0, kind: input, shape index: {}]
  %s1 = inlined_call_operand.vmem [shape: f32[8,256], index: 1, kind: input, shape index: {}]
  %s2 = inlined_call_operand.vmem [shape: f32[256,8], index: 2, kind: input, shape index: {}]
  %s3 = inlined_call_operand.vmem [shape: f32[8,8], index: 3, kind: input, shape index: {}]
  %s4 = inlined_call_operand.vmem [shape: f32[1,8], index: 4, kind: input, shape index: {}]
  %s5 = inlined_call_operand.hbm [shape: f32[1,1], index: 5, kind: output, shape index: {}]
  %s6 = sld [smem:[#allocation0]]
  $region38: #{tpu_custom_call.1} parent=0
    _
  %s8 = ssub.s32 1, %s6
  %s9 = scalar_select 0, %s8, %s6
  $region1: #{tpu_custom_call.1} parent=0
    #allocation3 [shape = 'u8[512]{0}', space=smem, size = 0x200, scoped, tag = 'output window, operand 0, single buffered']
    #allocation4 [shape = 's32[1]{0}', space=sflag, size = 0x4, scoped, tag = 'scoped memory for tpu_custom_call.1']
    %10 = vsyncpa [#allocation4], 0
    // Predicated region
    $region2: #{tpu_custom_call.1} parent=1 // pred_check
      _
    $region3: #{tpu_custom_call.1} parent=1 // pred_check_branch
      %12 = sbr.rel (0) target = $region5
    $region4: #{tpu_custom_call.1} parent=1 // pred_region
      _
    $region5: #{tpu_custom_call.1} parent=1 // pred_fallthru
      _
    // Predicated region
    $region6: #{tpu_custom_call.1} parent=1 // pred_check
      _
    $region7: #{tpu_custom_call.1} parent=1 // pred_check_branch
      %14 = sbr.rel (0) target = $region9
    $region8: #{tpu_custom_call.1} parent=1 // pred_region
      _
    $region9: #{tpu_custom_call.1} parent=1 // pred_fallthru
      _
    // Predicated region
    $region10: #{tpu_custom_call.1} parent=1 // pred_check
      _
    $region11: #{tpu_custom_call.1} parent=1 // pred_check_branch
      %16 = sbr.rel (0) target = $region13
    $region12: #{tpu_custom_call.1} parent=1 // pred_region
      _
    $region13: #{tpu_custom_call.1} parent=1 // pred_fallthru
      _
    // Predicated region
    $region14: #{tpu_custom_call.1} parent=1 // pred_check
      _
    $region15: #{tpu_custom_call.1} parent=1 // pred_check_branch
      %18 = sbr.rel (0) target = $region17
    $region16: #{tpu_custom_call.1} parent=1 // pred_region
      _
    $region17: #{tpu_custom_call.1} parent=1 // pred_fallthru
      _
    // Predicated region
    $region18: #{tpu_custom_call.1} parent=1 // pred_check
      _
    $region19: #{tpu_custom_call.1} parent=1 // pred_check_branch
      %20 = sbr.rel (0) target = $region21
    $region20: #{tpu_custom_call.1} parent=1 // pred_region
      _
    $region21: #{tpu_custom_call.1} parent=1 // pred_fallthru
      _
    %p21 = scmp.eq.s32.totalorder 0, 0
    // Predicated region
    $region22: #{tpu_custom_call.1} parent=1 // pred_check
      %p22 = pneg %p21
    $region23: #{tpu_custom_call.1} parent=1 // pred_check_branch
      %24 = sbr.rel (%p22) target = $region25
    $region24: #{tpu_custom_call.1} parent=1 // pred_region
      %vm25 = vcmask 57344
      %26 = vst.msk [vmem:[#allocation2] sm:$0x1] %vm25, 0.0
    $region25: #{tpu_custom_call.1} parent=1 // pred_fallthru
      _
    %v27 = vld [vmem:[%s0] sm:$0xff]
    %v28 = vld [vmem:[%s1] sm:$0xff]
    %v29 = vld [vmem:[%s1 + $0x8] sm:$0xff]
    %v30 = vld [vmem:[%s2] sm:$0xff]
    %v31 = vld [vmem:[%s2 + $0x8] sm:$0xff]
    %v32 = vld [vmem:[%s2 + $0x10] sm:$0xff]
    %v33 = vld [vmem:[%s2 + $0x18] sm:$0xff]
    %v34 = vld [vmem:[%s2 + $0x20] sm:$0xff]
    %v35 = vld [vmem:[%s2 + $0x28] sm:$0xff]
    %v36 = vld [vmem:[%s2 + $0x30] sm:$0xff]
    %v37 = vld [vmem:[%s2 + $0x38] sm:$0xff]
    %v38 = vld [vmem:[%s2 + $0x40] sm:$0xff]
    %v39 = vld [vmem:[%s2 + $0x48] sm:$0xff]
    %v40 = vld [vmem:[%s2 + $0x50] sm:$0xff]
    %v41 = vld [vmem:[%s2 + $0x58] sm:$0xff]
    %v42 = vld [vmem:[%s2 + $0x60] sm:$0xff]
    %v43 = vld [vmem:[%s2 + $0x68] sm:$0xff]
    %v44 = vld [vmem:[%s2 + $0x70] sm:$0xff]
    %v45 = vld [vmem:[%s2 + $0x78] sm:$0xff]
    %v46 = vld [vmem:[%s2 + $0x80] sm:$0xff]
    %v47 = vld [vmem:[%s2 + $0x88] sm:$0xff]
    %v48 = vld [vmem:[%s2 + $0x90] sm:$0xff]
    %v49 = vld [vmem:[%s2 + $0x98] sm:$0xff]
    %v50 = vld [vmem:[%s2 + $0xa0] sm:$0xff]
    %v51 = vld [vmem:[%s2 + $0xa8] sm:$0xff]
    %v52 = vld [vmem:[%s2 + $0xb0] sm:$0xff]
    %v53 = vld [vmem:[%s2 + $0xb8] sm:$0xff]
    %v54 = vld [vmem:[%s2 + $0xc0] sm:$0xff]
    %v55 = vld [vmem:[%s2 + $0xc8] sm:$0xff]
    %v56 = vld [vmem:[%s2 + $0xd0] sm:$0xff]
    %v57 = vld [vmem:[%s2 + $0xd8] sm:$0xff]
    %v58 = vld [vmem:[%s2 + $0xe0] sm:$0xff]
    %v59 = vld [vmem:[%s2 + $0xe8] sm:$0xff]
    %v60 = vld [vmem:[%s2 + $0xf0] sm:$0xff]
    %v61 = vld [vmem:[%s2 + $0xf8] sm:$0xff]
    %63 = vrot.lane.b32.xlu0 %v27, 32
    %v64 = vpop.permute.xlu0 %63
    %66 = vrot.lane.b32.xlu0 %v27, 64
    %v67 = vpop.permute.xlu0 %66
    %69 = vrot.lane.b32.xlu0 %v27, 96
    %v70 = vpop.permute.xlu0 %69
    %vm72 = vcmask 261120
    %v73 = vsel %vm72, %v27, %v64
    %vm74 = vcmask 523264
    %v75 = vsel %vm74, %v73, %v67
    %vm76 = vcmask 785408
    %v77 = vsel %vm76, %v75, %v70
    %v78 = vmul.f32 %v28, %v77
    %v79 = vmul.f32 %v29, %v77
    %80 = vmatprep.subr.mxu0 0.0
    %81 = vmatpush1.msra.mxu0 %v45
    %82 = vmatprep.subr.mxu0 0.0
    %83 = vmatpush1.msra.mxu0 %v44
    %84 = vmatprep.subr.mxu0 0.0
    %85 = vmatpush1.msra.mxu0 %v43
    %86 = vmatprep.subr.mxu0 0.0
    %87 = vmatpush1.msra.mxu0 %v42
    %88 = vmatprep.subr.mxu0 0.0
    %89 = vmatpush1.msra.mxu0 %v41
    %90 = vmatprep.subr.mxu0 0.0
    %91 = vmatpush1.msra.mxu0 %v40
    %92 = vmatprep.subr.mxu0 0.0
    %93 = vmatpush1.msra.mxu0 %v39
    %94 = vmatprep.subr.mxu0 0.0
    %95 = vmatpush1.msra.mxu0 %v38
    %96 = vmatprep.subr.mxu0 0.0
    %97 = vmatpush1.msra.mxu0 %v37
    %98 = vmatprep.subr.mxu0 0.0
    %99 = vmatpush1.msra.mxu0 %v36
    %100 = vmatprep.subr.mxu0 0.0
    %101 = vmatpush1.msra.mxu0 %v35
    %102 = vmatprep.subr.mxu0 0.0
    %103 = vmatpush1.msra.mxu0 %v34
    %104 = vmatprep.subr.mxu0 0.0
    %105 = vmatpush1.msra.mxu0 %v33
    %106 = vmatprep.subr.mxu0 0.0
    %107 = vmatpush1.msra.mxu0 %v32
    %108 = vmatprep.subr.mxu0 0.0
    %109 = vmatpush1.msra.mxu0 %v31
    %110 = vmatprep.subr.mxu0 0.0
    %111 = vmatpush1.msra.mxu0 %v30
    %112 = vmatprep.subr.mxu0 0.0
    %113 = vmatpush2.msra.mxu0 %v61
    %114 = vmatprep.subr.mxu0 0.0
    %115 = vmatpush2.msra.mxu0 %v60
    %116 = vmatprep.subr.mxu0 0.0
    %117 = vmatpush2.msra.mxu0 %v59
    %118 = vmatprep.subr.mxu0 0.0
    %119 = vmatpush2.msra.mxu0 %v58
    %120 = vmatprep.subr.mxu0 0.0
    %121 = vmatpush2.msra.mxu0 %v57
    %122 = vmatprep.subr.mxu0 0.0
    %123 = vmatpush2.msra.mxu0 %v56
    %124 = vmatprep.subr.mxu0 0.0
    %125 = vmatpush2.msra.mxu0 %v55
    %126 = vmatprep.subr.mxu0 0.0
    %127 = vmatpush2.msra.mxu0 %v54
    %128 = vmatprep.subr.mxu0 0.0
    %129 = vmatpush2.msra.mxu0 %v53
    %130 = vmatprep.subr.mxu0 0.0
    %131 = vmatpush2.msra.mxu0 %v52
    %132 = vmatprep.subr.mxu0 0.0
    %133 = vmatpush2.msra.mxu0 %v51
    %134 = vmatprep.subr.mxu0 0.0
    %135 = vmatpush2.msra.mxu0 %v50
    %136 = vmatprep.subr.mxu0 0.0
    %137 = vmatpush2.msra.mxu0 %v49
    %138 = vmatprep.subr.mxu0 0.0
    %139 = vmatpush2.msra.mxu0 %v48
    %140 = vmatprep.subr.mxu0 0.0
    %141 = vmatpush2.msra.mxu0 %v47
    %142 = vmatprep.subr.mxu0 0.0
    %143 = vmatpush2.msra.mxu0 %v46
    %144 = vmatprep.mubr.f32.mxu0 %v79
    %145 = vmatmul.mubr.f32.gmra.mxu0 %v78
    %v146 = vpop.f32.mrf.mxu0
    %v147 = vadd.f32 0.0, %v146
    %v148 = vpop.f32.mrf.mxu0
    %149 = vdwg.mxu0
    %v150 = vmul.f32 %v28, %v28
    %v151 = vmul.f32 %v29, %v29
    %152 = vmatprep.subr.mxu0 0.0
    %153 = vmatpush1.msra.mxu0 %v45
    %154 = vmatprep.subr.mxu0 0.0
    %155 = vmatpush1.msra.mxu0 %v44
    %156 = vmatprep.subr.mxu0 0.0
    %157 = vmatpush1.msra.mxu0 %v43
    %158 = vmatprep.subr.mxu0 0.0
    %159 = vmatpush1.msra.mxu0 %v42
    %160 = vmatprep.subr.mxu0 0.0
    %161 = vmatpush1.msra.mxu0 %v41
    %162 = vmatprep.subr.mxu0 0.0
    %163 = vmatpush1.msra.mxu0 %v40
    %164 = vmatprep.subr.mxu0 0.0
    %165 = vmatpush1.msra.mxu0 %v39
    %166 = vmatprep.subr.mxu0 0.0
    %167 = vmatpush1.msra.mxu0 %v38
    %168 = vmatprep.subr.mxu0 0.0
    %169 = vmatpush1.msra.mxu0 %v37
    %170 = vmatprep.subr.mxu0 0.0
    %171 = vmatpush1.msra.mxu0 %v36
    %172 = vmatprep.subr.mxu0 0.0
    %173 = vmatpush1.msra.mxu0 %v35
    %174 = vmatprep.subr.mxu0 0.0
    %175 = vmatpush1.msra.mxu0 %v34
    %176 = vmatprep.subr.mxu0 0.0
    %177 = vmatpush1.msra.mxu0 %v33
    %178 = vmatprep.subr.mxu0 0.0
    %179 = vmatpush1.msra.mxu0 %v32
    %180 = vmatprep.subr.mxu0 0.0
    %181 = vmatpush1.msra.mxu0 %v31
    %182 = vmatprep.subr.mxu0 0.0
    %183 = vmatpush1.msra.mxu0 %v30
    %184 = vmatprep.subr.mxu0 0.0
    %185 = vmatpush2.msra.mxu0 %v61
    %186 = vmatprep.subr.mxu0 0.0
    %187 = vmatpush2.msra.mxu0 %v60
    %188 = vmatprep.subr.mxu0 0.0
    %189 = vmatpush2.msra.mxu0 %v59
    %190 = vmatprep.subr.mxu0 0.0
    %191 = vmatpush2.msra.mxu0 %v58
    %192 = vmatprep.subr.mxu0 0.0
    %193 = vmatpush2.msra.mxu0 %v57
    %194 = vmatprep.subr.mxu0 0.0
    %195 = vmatpush2.msra.mxu0 %v56
    %196 = vmatprep.subr.mxu0 0.0
    %197 = vmatpush2.msra.mxu0 %v55
    %198 = vmatprep.subr.mxu0 0.0
    %199 = vmatpush2.msra.mxu0 %v54
    %200 = vmatprep.subr.mxu0 0.0
    %201 = vmatpush2.msra.mxu0 %v53
    %202 = vmatprep.subr.mxu0 0.0
    %203 = vmatpush2.msra.mxu0 %v52
    %204 = vmatprep.subr.mxu0 0.0
    %205 = vmatpush2.msra.mxu0 %v51
    %206 = vmatprep.subr.mxu0 0.0
    %207 = vmatpush2.msra.mxu0 %v50
    %208 = vmatprep.subr.mxu0 0.0
    %209 = vmatpush2.msra.mxu0 %v49
    %210 = vmatprep.subr.mxu0 0.0
    %211 = vmatpush2.msra.mxu0 %v48
    %212 = vmatprep.subr.mxu0 0.0
    %213 = vmatpush2.msra.mxu0 %v47
    %214 = vmatprep.subr.mxu0 0.0
    %215 = vmatpush2.msra.mxu0 %v46
    %216 = vmatprep.mubr.f32.mxu0 %v151
    %217 = vmatmul.mubr.f32.gmra.mxu0 %v150
    %v218 = vpop.f32.mrf.mxu0
    %v219 = vadd.f32 0.0, %v218
    %v220 = vpop.f32.mrf.mxu0
    %221 = vdwg.mxu0
    %v222 = vmul.f32 %v27, %v27
    %v223 = vsel %vm72, %v222, 0.0
    %224 = vadd.xlane.f32.xlu0 %v223
    %v225 = vpop.xlane.xlu0 %224
    %v226 = vrsqrt.pop %v225
    %v227 = vmul.f32 %v225, %v226
    %vm228 = vcmp.eq.f32.partialorder %v225, inf
    %v229 = vsel %vm228, %v225, %v227
    %vm230 = vcmp.eq.f32.partialorder %v225, 0.0
    %v231 = vand.u32 %v225, 2147483648
    %v232 = vsel %vm230, %v231, %v229
    %v233 = vrsqrt.pop %v219
    %v234 = vmul.f32 %v219, %v233
    %vm235 = vcmp.eq.f32.partialorder %v219, inf
    %v236 = vsel %vm235, %v219, %v234
    %vm237 = vcmp.eq.f32.partialorder %v219, 0.0
    %v238 = vand.u32 %v219, 2147483648
    %v239 = vsel %vm237, %v238, %v236
    %v240 = vmul.f32 %v232, %v239
    %v241 = vmax.f32 %v240, 1e-08
    %v242 = vrcp.pop %v241
    %v243 = vmul.f32 %v147, %v242
    %v244 = vmul.f32 %v243, 1.442695
    %v245 = vpow.pop %v244
    %v246 = vld [vmem:[#allocation2] sm:$0x1]
    %vm247 = vcmask 64512
    %v248 = vsel %vm247, %v245, 0.0
    %v249 = vrot.slane %v248, 4
    %v250 = vadd.f32 %v248, %v249
    %v251 = vrot.slane %v250, 2
    %v252 = vadd.f32 %v250, %v251
    %v253 = vrot.slane %v252, 1
    %v254 = vadd.f32 %v252, %v253
    %v255 = vadd.f32 %v246, %v254
    %vm256 = vcmask 57344
    %257 = vst.msk [vmem:[#allocation2] sm:$0x1] %vm256, %v255
    // Predicated region
    $region26: #{tpu_custom_call.1} parent=1 // pred_check
      %p258 = pneg %p21
    $region27: #{tpu_custom_call.1} parent=1 // pred_check_branch
      %260 = sbr.rel (%p258) target = $region29
    $region28: #{tpu_custom_call.1} parent=1 // pred_region
      %v261 = vld [vmem:[#allocation2] sm:$0x1]
      %v262 = vld [vmem:[%s3] sm:$0xff]
      %v264 = vsel %vm247, %v261, 0
      %266 = vmatprep.subr.mxu0 0.0
      %267 = vmatpush1.msra.mxu0 0.0
      %268 = vmatprep.subr.mxu0 0.0
      %269 = vmatpush1.msra.mxu0 0.0
      %270 = vmatprep.subr.mxu0 0.0
      %271 = vmatpush1.msra.mxu0 0.0
      %272 = vmatprep.subr.mxu0 0.0
      %273 = vmatpush1.msra.mxu0 0.0
      %274 = vmatprep.subr.mxu0 0.0
      %275 = vmatpush1.msra.mxu0 0.0
      %276 = vmatprep.subr.mxu0 0.0
      %277 = vmatpush1.msra.mxu0 0.0
      %278 = vmatprep.subr.mxu0 0.0
      %279 = vmatpush1.msra.mxu0 0.0
      %280 = vmatprep.subr.mxu0 0.0
      %281 = vmatpush1.msra.mxu0 0.0
      %282 = vmatprep.subr.mxu0 0.0
      %283 = vmatpush1.msra.mxu0 0.0
      %284 = vmatprep.subr.mxu0 0.0
      %285 = vmatpush1.msra.mxu0 0.0
      %286 = vmatprep.subr.mxu0 0.0
      %287 = vmatpush1.msra.mxu0 0.0
      %288 = vmatprep.subr.mxu0 0.0
      %289 = vmatpush1.msra.mxu0 0.0
      %290 = vmatprep.subr.mxu0 0.0
      %291 = vmatpush1.msra.mxu0 0.0
      %292 = vmatprep.subr.mxu0 0.0
      %293 = vmatpush1.msra.mxu0 0.0
      %294 = vmatprep.subr.mxu0 0.0
      %295 = vmatpush1.msra.mxu0 0.0
      %296 = vmatprep.subr.mxu0 0.0
      %297 = vmatpush1.msra.mxu0 %v262
      %298 = vmatprep.subr.mxu0 0.0
      %299 = vmatpush2.msra.mxu0 0.0
      %300 = vmatprep.subr.mxu0 0.0
      %301 = vmatpush2.msra.mxu0 0.0
      %302 = vmatprep.subr.mxu0 0.0
      %303 = vmatpush2.msra.mxu0 0.0
      %304 = vmatprep.subr.mxu0 0.0
      %305 = vmatpush2.msra.mxu0 0.0
      %306 = vmatprep.subr.mxu0 0.0
      %307 = vmatpush2.msra.mxu0 0.0
      %308 = vmatprep.subr.mxu0 0.0
      %309 = vmatpush2.msra.mxu0 0.0
      %310 = vmatprep.subr.mxu0 0.0
      %311 = vmatpush2.msra.mxu0 0.0
      %312 = vmatprep.subr.mxu0 0.0
      %313 = vmatpush2.msra.mxu0 0.0
      %314 = vmatprep.subr.mxu0 0.0
      %315 = vmatpush2.msra.mxu0 0.0
      %316 = vmatprep.subr.mxu0 0.0
      %317 = vmatpush2.msra.mxu0 0.0
      %318 = vmatprep.subr.mxu0 0.0
      %319 = vmatpush2.msra.mxu0 0.0
      %320 = vmatprep.subr.mxu0 0.0
      %321 = vmatpush2.msra.mxu0 0.0
      %322 = vmatprep.subr.mxu0 0.0
      %323 = vmatpush2.msra.mxu0 0.0
      %324 = vmatprep.subr.mxu0 0.0
      %325 = vmatpush2.msra.mxu0 0.0
      %326 = vmatprep.subr.mxu0 0.0
      %327 = vmatpush2.msra.mxu0 0.0
      %328 = vmatprep.subr.mxu0 0.0
      %329 = vmatpush2.msra.mxu0 0.0
      %330 = vmatprep.mubr.f32.mxu0 0.0
      %331 = vmatmul.mubr.f32.gmra.mxu0 %v264
      %v332 = vpop.f32.mrf.mxu0
      %v333 = vadd.f32 0.0, %v332
      %v334 = vpop.f32.mrf.mxu0
      %335 = vdwg.mxu0
      %v336 = vlog2.pop %v261
      %v337 = vmul.f32 %v336, 0.6931472
      %v338 = vlog2.pop %v333
      %v339 = vmul.f32 %v338, 0.6931472
      %v340 = vsub.f32 %v337, %v339
      %v341 = vld [vmem:[%s4] sm:$0x1]
      %v342 = vmul.f32 %v340, %v341
      %v343 = vsel %vm256, %v342, 0.0
      %344 = vadd.xlane.f32.xlu0 %v343
      %v345 = vpop.xlane.xlu0 %344
      %v346 = vrot.slane %v345, 4
      %v347 = vadd.f32 %v345, %v346
      %v348 = vrot.slane %v347, 2
      %v349 = vadd.f32 %v347, %v348
      %v350 = vrot.slane %v349, 1
      %v351 = vadd.f32 %v349, %v350
      %s352 = vtos %v351
      %s353 = ssub.f32 0.0, %s352
      %s354 = scalar_lea.smem [#allocation3], 0
      %355 = sst [smem:[%s354]] %s353
    $region29: #{tpu_custom_call.1} parent=1 // pred_fallthru
      _
    // Predicated region
    $region30: #{tpu_custom_call.1} parent=1 // pred_check
      _
    $region31: #{tpu_custom_call.1} parent=1 // pred_check_branch
      %357 = sbr.rel (0) target = $region33
    $region32: #{tpu_custom_call.1} parent=1 // pred_region
      %s359 = ssub.s32 16, 16
      %360 = vsyncadd [#allocation4], %s359
      %363 = dma.smem_to_hbm [#allocation3], 16, %s5, [#allocation4]
    $region33: #{tpu_custom_call.1} parent=1 // pred_fallthru
      _
    // Predicated region
    $region34: #{tpu_custom_call.1} parent=1 // pred_check
      _
    $region35: #{tpu_custom_call.1} parent=1 // pred_check_branch
      %365 = sbr.rel (0) target = $region37
    $region36: #{tpu_custom_call.1} parent=1 // pred_region
      %366 = dma.done [#allocation4], 16
    $region37: #{tpu_custom_call.1} parent=1 // pred_fallthru
      _
    %367 = sfence
    %368 = vsyncpa [#allocation4], 1

</llo_original>
